<compile_context>
chip_gen: v7x
topology: tpu7x:2x2x1
jax: 0.10.0
libtpu: 0.0.40
codegen_flags: <defaults>
</compile_context>

<pallas_src>
import functools

import jax
import jax.numpy as jnp
from jax.experimental import pallas as pl
from jax.experimental.pallas import tpu as pltpu

ACT_DTYPE = jnp.bfloat16          # inter-kernel activation dtype
NEG_INF = -1e9                    # additive mask value (kept in f32)
LN_EPS_VIT = 1e-6
LN_EPS_BERT = 1e-12
VMEM_SPEC = pl.BlockSpec(memory_space=pltpu.MemorySpace.VMEM)
VMEM_LIMIT = 32 * 1024 * 1024


def _const_spec(a):
    """Full-array block that is revisited (resident) across all grid steps."""
    zeros = (0,) * a.ndim
    return pl.BlockSpec(a.shape, lambda *_: zeros)


# ---------------------------------------------------------------------------
# In-kernel helpers (traced inside Pallas kernels only)
# ---------------------------------------------------------------------------
def _mm(a, w):
    """bf16 MXU matmul with f32 accumulation."""
    return jnp.dot(a.astype(jnp.bfloat16), w.astype(jnp.bfloat16),
                   preferred_element_type=jnp.float32)


def _ln(x, g, b, eps):
    mu = jnp.mean(x, axis=-1, keepdims=True)
    var = jnp.mean((x - mu) ** 2, axis=-1, keepdims=True)
    return (x - mu) * jax.lax.rsqrt(var + eps) * g + b


def _mha_proj(q, k, v, wo, n_heads, scale, bias=None):
    """Multi-head attention + output projection, heads split via static slices.

    q: (Tq, D) f32, k/v: (Tk, D) f32, wo: (D, Do) bf16, bias: (Tq, Tk) f32|None.
    Returns (Tq, Do) f32 == concat_h(softmax(q_h k_h^T) v_h) @ wo.
    """
    tq, d = q.shape
    dh = d // n_heads
    do = wo.shape[1]
    acc = jnp.zeros((tq, do), jnp.float32)
    for h in range(n_heads):
        sl = slice(h * dh, (h + 1) * dh)
        qh = q[:, sl].astype(jnp.bfloat16)
        kh = k[:, sl].astype(jnp.bfloat16)
        vh = v[:, sl].astype(jnp.bfloat16)
        s = jax.lax.dot_general(qh, kh, (((1,), (1,)), ((), ())),
                                preferred_element_type=jnp.float32) * scale
        if bias is not None:
            s = s + bias
        s = s - jnp.max(s, axis=-1, keepdims=True)
        p = jnp.exp(s)
        p = p * pl.reciprocal(jnp.sum(p, axis=-1, keepdims=True), approx=True)
        oh = jnp.dot(p.astype(jnp.bfloat16), vh,
                     preferred_element_type=jnp.float32)          # (Tq, Dh)
        # fold output projection into the head loop: concat(o_h) @ wo
        acc = acc + jnp.dot(oh.astype(jnp.bfloat16), wo[sl, :],
                            preferred_element_type=jnp.float32)
    return acc


# ---------------------------------------------------------------------------
# Kernels
# ---------------------------------------------------------------------------
def _linear_kernel(x_ref, w_ref, b_ref, o_ref, acc_ref, *, act):
    """Tiled matmul + bias (+ optional GELU) with f32 VMEM accumulator."""
    @pl.when(pl.program_id(2) == 0)
    def _():
        acc_ref[...] = jnp.zeros_like(acc_ref)

    acc_ref[...] += jnp.dot(x_ref[...].astype(jnp.bfloat16),
                            w_ref[...].astype(jnp.bfloat16),
                            preferred_element_type=jnp.float32)

    @pl.when(pl.program_id(2) == pl.num_programs(2) - 1)
    def _():
        y = acc_ref[...] + b_ref[...].astype(jnp.float32)
        if act == "gelu":
            y = jax.nn.gelu(y, approximate=True)
        o_ref[...] = y.astype(o_ref.dtype)


def _layernorm_kernel(x_ref, g_ref, b_ref, o_ref, *, eps):
    x = x_ref[...].astype(jnp.float32)
    o_ref[...] = _ln(x, g_ref[...], b_ref[...], eps).astype(o_ref.dtype)


def _vit_block_kernel(x_ref, ln1g, ln1b, wqkv, bqkv, wo, bo,
                      ln2g, ln2b, w1, b1, w2, b2, lnfg, lnfb,
                      o_ref, *, n_heads, final_ln):
    """One pre-LN ViT transformer block for a single frame (fused)."""
    x = x_ref[0].astype(jnp.float32)                          # (Tv, D)
    d = x.shape[-1]
    # LN1 + fused QKV + attention + output projection (residual)
    h = _ln(x, ln1g[...], ln1b[...], LN_EPS_VIT)
    qkv = _mm(h, wqkv[...]) + bqkv[...]
    q, k, v = qkv[:, :d], qkv[:, d:2 * d], qkv[:, 2 * d:3 * d]
    a = _mha_proj(q, k, v, wo[...], n_heads, (d // n_heads) ** -0.5)
    x = x + a + bo[...]
    # LN2 + MLP (residual)
    h = _ln(x, ln2g[...], ln2b[...], LN_EPS_VIT)
    h = jax.nn.gelu(_mm(h, w1[...]) + b1[...], approximate=True)
    x = x + _mm(h, w2[...]) + b2[...]
    if final_ln:                                              # fused final LN
        x = _ln(x, lnfg[...], lnfb[...], LN_EPS_VIT)
    o_ref[0] = x.astype(o_ref.dtype)


def _dec_layer_kernel(x_ref, mask_ref, enc_ref,
                      s_wqkv, s_b, s_wo, s_bo, s_lng, s_lnb,
                      c_wq, c_bq, c_wkv, c_bkv, c_wo, c_bo, c_lng, c_lnb,
                      f_w1, f_b1, f_w2, f_b2, f_lng, f_lnb,
                      o_ref, *, n_heads):
    """One BERT decoder layer (self-attn + cross-attn + FFN), fused, per batch row."""
    x = x_ref[0].astype(jnp.float32)                          # (T, D)
    enc = enc_ref[0]                                          # (Tk, Dv) bf16
    am = mask_ref[0]                                          # (1, T) int32
    t, d = x.shape
    scale = (d // n_heads) ** -0.5

    # --- causal self-attention; causal+padding mask built in-kernel ---------
    qkv = _mm(x, s_wqkv[...]) + s_b[...]
    q, k, v = qkv[:, :d], qkv[:, d:2 * d], qkv[:, 2 * d:3 * d]
    row = jax.lax.broadcasted_iota(jnp.int32, (t, t), 0)
    col = jax.lax.broadcasted_iota(jnp.int32, (t, t), 1)
    allow = (col <= row) & (am > 0)                           # (T,T) & (1,T)
    bias = jnp.where(allow, 0.0, NEG_INF).astype(jnp.float32)
    a = _mha_proj(q, k, v, s_wo[...], n_heads, scale, bias)
    x = _ln(x + a + s_bo[...], s_lng[...], s_lnb[...], LN_EPS_BERT)

    # --- cross-attention to video tokens (video_atts all ones -> no mask) ---
    q = _mm(x, c_wq[...]) + c_bq[...]
    kv = _mm(enc, c_wkv[...]) + c_bkv[...]
    k, v = kv[:, :d], kv[:, d:2 * d]
    a = _mha_proj(q, k, v, c_wo[...], n_heads, scale)
    x = _ln(x + a + c_bo[...], c_lng[...], c_lnb[...], LN_EPS_BERT)

    # --- FFN -----------------------------------------------------------------
    h = jax.nn.gelu(_mm(x, f_w1[...]) + f_b1[...], approximate=True)
    x = _ln(x + _mm(h, f_w2[...]) + f_b2[...], f_lng[...], f_lnb[...],
            LN_EPS_BERT)
    o_ref[0] = x.astype(o_ref.dtype)


def _lmhead_ce_kernel(x_ref, trw_ref, trb_ref, lng_ref, lnb_ref,
                      wv_ref, bv_ref, lab_ref, loss_ref,
                      h_scr, m_scr, l_scr, t_scr, s_scr,
                      *, vocab, chunk, eps):
    """Fused BertLMPredictionHead + vocab projection + label-smoothed CE.

    Grid over vocab chunks ('arbitrary'); online logsumexp so (R, V) logits
    never leave VMEM.
    """
    j = pl.program_id(0)

    @pl.when(j == 0)
    def _():
        # prediction-head transform: dense + gelu + LN  (computed once)
        h = _mm(x_ref[...], trw_ref[...]) + trb_ref[...]
        h = jax.nn.gelu(h, approximate=True)
        h = _ln(h, lng_ref[...], lnb_ref[...], LN_EPS_BERT)
        h_scr[...] = h.astype(jnp.bfloat16)
        m_scr[...] = jnp.full_like(m_scr, -1e30)
        l_scr[...] = jnp.zeros_like(l_scr)
        t_scr[...] = jnp.zeros_like(t_scr)
        s_scr[...] = jnp.zeros_like(s_scr)

    logits = jnp.dot(h_scr[...], wv_ref[...],
                     preferred_element_type=jnp.float32) + bv_ref[...]  # (R, CV)
    labels = lab_ref[...]                                               # (R, 1)
    r, cv = logits.shape

    # online logsumexp over the vocab axis
    m_prev = m_scr[...]
    m_new = jnp.maximum(m_prev, jnp.max(logits, axis=-1, keepdims=True))
    l_scr[...] = (l_scr[...] * jnp.exp(m_prev - m_new)
                  + jnp.sum(jnp.exp(logits - m_new), axis=-1, keepdims=True))
    m_scr[...] = m_new
    s_scr[...] = s_scr[...] + jnp.sum(logits, axis=-1, keepdims=True)

    # gather target logit if the label falls inside this vocab chunk
    local = labels - j * chunk
    iota = jax.lax.broadcasted_iota(jnp.int32, (r, cv), 1)
    hit = iota == local
    t_scr[...] = t_scr[...] + jnp.sum(jnp.where(hit, logits, 0.0),
                                      axis=-1, keepdims=True)

    @pl.when(j == pl.num_programs(0) - 1)
    def _():
        lse = m_scr[...] + jnp.log(l_scr[...])                # (R, 1)
        nll = lse - t_scr[...]
        smooth = lse - s_scr[...] * (1.0 / vocab)
        per_tok = (1.0 - eps) * nll + eps * smooth
        valid = (labels != -100).astype(jnp.float32)
        loss_ref[0, 0] = (jnp.sum(per_tok * valid)
                          / jnp.maximum(jnp.sum(valid), 1.0))


# ---------------------------------------------------------------------------
# Wrappers (glue + pallas_call plumbing)
# ---------------------------------------------------------------------------
def linear(x, w, b, act="none", tm=256, tn=256, tk=512, out_dtype=ACT_DTYPE):
    """Tiled matmul+bias(+gelu); bf16 MXU operands, f32 accumulation."""
    orig = x.shape
    x2 = x.reshape(-1, orig[-1])
    m, k = x2.shape
    n = w.shape[1]
    tm = m if m < tm else tm
    tn = n if n < tn else tn
    tk = k if k < tk else tk
    assert m % tm == 0 and n % tn == 0 and k % tk == 0
    grid = (m // tm, n // tn, k // tk)
    out = pl.pallas_call(
        functools.partial(_linear_kernel, act=act),
        out_shape=jax.ShapeDtypeStruct((m, n), out_dtype),
        grid=grid,
        in_specs=[pl.BlockSpec((tm, tk), lambda i, j, kk: (i, kk)),
                  pl.BlockSpec((tk, tn), lambda i, j, kk: (kk, j)),
                  pl.BlockSpec((1, tn), lambda i, j, kk: (0, j))],
        out_specs=pl.BlockSpec((tm, tn), lambda i, j, kk: (i, j)),
        scratch_shapes=[pltpu.VMEM((tm, tn), jnp.float32)],
        compiler_params=pltpu.CompilerParams(
            dimension_semantics=("parallel", "parallel", "arbitrary"),
            vmem_limit_bytes=VMEM_LIMIT),
    )(x2, w.astype(jnp.bfloat16), b.reshape(1, -1).astype(jnp.float32))
    return out.reshape(orig[:-1] + (n,))


def layernorm(x2, g, b, eps=LN_EPS_BERT):
    return pl.pallas_call(
        functools.partial(_layernorm_kernel, eps=eps),
        out_shape=jax.ShapeDtypeStruct(x2.shape, ACT_DTYPE),
        in_specs=[VMEM_SPEC] * 3,
        out_specs=VMEM_SPEC,
    )(x2, g.reshape(1, -1).astype(jnp.float32),
      b.reshape(1, -1).astype(jnp.float32))


def _bf(a):
    return a.astype(jnp.bfloat16)


def _r1(a):
    return a.reshape(1, -1).astype(jnp.float32)


def vit_block(x, blk, p, final_ln):
    bn, tv, d = x.shape
    args = [
        x,
        _r1(blk["ln1_g"]), _r1(blk["ln1_b"]),
        _bf(blk["wqkv"]), _r1(blk["bqkv"]),
        _bf(blk["wo"]), _r1(blk["bo"]),
        _r1(blk["ln2_g"]), _r1(blk["ln2_b"]),
        _bf(blk["fc1_w"]), _r1(blk["fc1_b"]),
        _bf(blk["fc2_w"]), _r1(blk["fc2_b"]),
        _r1(p["ln_g"]), _r1(p["ln_b"]),
    ]
    in_specs = [pl.BlockSpec((1, tv, d), lambda f: (f, 0, 0))] + \
               [_const_spec(a) for a in args[1:]]
    return pl.pallas_call(
        functools.partial(_vit_block_kernel, n_heads=p["heads"],
                          final_ln=final_ln),
        out_shape=jax.ShapeDtypeStruct((bn, tv, d), ACT_DTYPE),
        grid=(bn,),
        in_specs=in_specs,
        out_specs=pl.BlockSpec((1, tv, d), lambda f: (f, 0, 0)),
        compiler_params=pltpu.CompilerParams(
            dimension_semantics=("parallel",),
            vmem_limit_bytes=VMEM_LIMIT),
    )(*args)


def vit_encode(frames, p):
    """frames: (B*N, C, H, W) -> tokens (B*N, 1 + num_patches, Dv) bf16."""
    bn, c, hh, ww = frames.shape
    ph = p["patch"]
    nh, nw = hh // ph, ww // ph
    # patch embedding == Conv2d(kernel=stride=patch) as a tiled matmul
    x = frames.reshape(bn, c, nh, ph, nw, ph).transpose(0, 2, 4, 1, 3, 5)
    x = x.reshape(bn * nh * nw, c * ph * ph)
    x = linear(x, p["patch_w"], p["patch_b"])                 # (BN*P, Dv) bf16
    x = x.reshape(bn, nh * nw, p["dim"])
    cls = jnp.broadcast_to(p["cls"].astype(ACT_DTYPE), (bn, 1, p["dim"]))
    x = jnp.concatenate([cls, x], axis=1) + p["pos"].astype(ACT_DTYPE)
    n_blocks = len(p["blocks"])
    for bi, blk in enumerate(p["blocks"]):
        x = vit_block(x, blk, p, final_ln=(bi == n_blocks - 1))
    return x


def dec_layer(x, mask3, enc, lyr, heads):
    b, t, d = x.shape
    _, tk, dv = enc.shape
    args = [
        x, mask3, enc,
        _bf(lyr["self_wqkv"]), _r1(lyr["self_b"]),
        _bf(lyr["self_wo"]), _r1(lyr["self_bo"]),
        _r1(lyr["self_ln_g"]), _r1(lyr["self_ln_b"]),
        _bf(lyr["cross_wq"]), _r1(lyr["cross_bq"]),
        _bf(lyr["cross_wkv"]), _r1(lyr["cross_bkv"]),
        _bf(lyr["cross_wo"]), _r1(lyr["cross_bo"]),
        _r1(lyr["cross_ln_g"]), _r1(lyr["cross_ln_b"]),
        _bf(lyr["fc1_w"]), _r1(lyr["fc1_b"]),
        _bf(lyr["fc2_w"]), _r1(lyr["fc2_b"]),
        _r1(lyr["out_ln_g"]), _r1(lyr["out_ln_b"]),
    ]
    in_specs = [pl.BlockSpec((1, t, d), lambda i: (i, 0, 0)),
                pl.BlockSpec((1, 1, t), lambda i: (i, 0, 0)),
                pl.BlockSpec((1, tk, dv), lambda i: (i, 0, 0))] + \
               [_const_spec(a) for a in args[3:]]
    return pl.pallas_call(
        functools.partial(_dec_layer_kernel, n_heads=heads),
        out_shape=jax.ShapeDtypeStruct((b, t, d), ACT_DTYPE),
        grid=(b,),
        in_specs=in_specs,
        out_specs=pl.BlockSpec((1, t, d), lambda i: (i, 0, 0)),
        compiler_params=pltpu.CompilerParams(
            dimension_semantics=("parallel",),
            vmem_limit_bytes=VMEM_LIMIT),
    )(*args)


def lmhead_ce(x, labels, p, chunk=128, eps=0.1):
    r, d = x.shape
    v = p["vocab"]
    chunk = min(chunk, v)
    assert v % chunk == 0
    args = [x,
            _bf(p["head_tr_w"]), _r1(p["head_tr_b"]),
            _r1(p["head_ln_g"]), _r1(p["head_ln_b"]),
            _bf(p["dec_w"]), _r1(p["dec_b"]),
            labels]
    in_specs = [_const_spec(args[0]), _const_spec(args[1]), _const_spec(args[2]),
                _const_spec(args[3]), _const_spec(args[4]),
                pl.BlockSpec((d, chunk), lambda j: (0, j)),
                pl.BlockSpec((1, chunk), lambda j: (0, j)),
                _const_spec(args[7])]
    loss = pl.pallas_call(
        functools.partial(_lmhead_ce_kernel, vocab=v, chunk=chunk, eps=eps),
        out_shape=jax.ShapeDtypeStruct((1, 1), jnp.float32),
        grid=(v // chunk,),
        in_specs=in_specs,
        out_specs=pl.BlockSpec((1, 1), lambda j: (0, 0)),
        scratch_shapes=[pltpu.VMEM((r, d), jnp.bfloat16),
                        pltpu.VMEM((r, 1), jnp.float32),
                        pltpu.VMEM((r, 1), jnp.float32),
                        pltpu.VMEM((r, 1), jnp.float32),
                        pltpu.VMEM((r, 1), jnp.float32)],
        compiler_params=pltpu.CompilerParams(
            dimension_semantics=("arbitrary",),
            vmem_limit_bytes=VMEM_LIMIT),
    )(*args)
    return loss[0, 0]


def bert_decoder_loss(input_ids, attention_mask, enc_hidden, labels, p):
    b, t = input_ids.shape
    d = p["dim"]
    tok = jnp.take(p["word_emb"], input_ids, axis=0)          # (B, T, D) f32
    x = tok + p["pos_emb"][:t][None]
    x = layernorm(x.reshape(b * t, d), p["emb_ln_g"], p["emb_ln_b"]
                  ).reshape(b, t, d)
    mask3 = attention_mask.astype(jnp.int32).reshape(b, 1, t)
    for lyr in p["layers"]:
        x = dec_layer(x, mask3, enc_hidden, lyr, p["heads"])
    # shift: predict token t+1 from position t; head+CE fused (no HBM logits)
    xs = x[:, :-1].reshape(b * (t - 1), d)
    tgt = labels[:, 1:].reshape(-1, 1).astype(jnp.int32)
    return lmhead_ce(xs, tgt, p)


def blip_video_caption_forward(video, input_ids, attention_mask, params):
    """Equivalent of BLIP_Video_Caption.forward(video, caption, training_mode='xe')."""
    b, n, c, h, w = video.shape
    frames = video.reshape(b * n, c, h, w)
    ve = vit_encode(frames, params["vit"])                    # (B*N, Tv, Dv)
    tv, dv = ve.shape[1], ve.shape[2]
    video_embeds = ve.reshape(b, n * tv, dv)
    # video_atts = ones(B, N*Tv) -> cross-attention mask is a no-op, omitted.

    # tokenizer side-effects (input_ids already tokenized outside; glue only)
    input_ids = input_ids.at[:, 0].set(params["bos_token_id"])
    targets = jnp.where(input_ids == params["pad_token_id"], -100, input_ids)
    targets = targets.at[:, :params["prompt_length"]].set(-100)

    return bert_decoder_loss(input_ids, attention_mask, video_embeds, targets,
                             params["bert"])


# ---------------------------------------------------------------------------
# Deterministic parameter init (synthetic, small but lane-dense config)
# ---------------------------------------------------------------------------
def init_params(key):
    ks = iter(jax.random.split(key, 32))

    def nrm(shape, scale=0.02):
        return scale * jax.random.normal(next(ks), shape, jnp.float32)

    C, PATCH, DV, HV, MLPV, IMG = 3, 8, 128, 4, 256, 16
    n_patches = (IMG // PATCH) ** 2
    vit_blk = dict(
        ln1_g=jnp.ones((DV,), jnp.float32), ln1_b=jnp.zeros((DV,), jnp.float32),
        wqkv=nrm((DV, 3 * DV)), bqkv=jnp.zeros((3 * DV,), jnp.float32),
        wo=nrm((DV, DV)), bo=jnp.zeros((DV,), jnp.float32),
        ln2_g=jnp.ones((DV,), jnp.float32), ln2_b=jnp.zeros((DV,), jnp.float32),
        fc1_w=nrm((DV, MLPV)), fc1_b=jnp.zeros((MLPV,), jnp.float32),
        fc2_w=nrm((MLPV, DV)), fc2_b=jnp.zeros((DV,), jnp.float32))
    vit = dict(patch=PATCH, dim=DV, heads=HV,
               patch_w=nrm((C * PATCH * PATCH, DV)),
               patch_b=jnp.zeros((DV,), jnp.float32),
               cls=nrm((1, 1, DV)), pos=nrm((1, 1 + n_patches, DV)),
               blocks=[vit_blk],
               ln_g=jnp.ones((DV,), jnp.float32),
               ln_b=jnp.zeros((DV,), jnp.float32))

    D, H, INTER, VOCAB, MAXPOS = 128, 4, 256, 512, 40
    bert_layer = dict(
        self_wqkv=nrm((D, 3 * D)), self_b=jnp.zeros((3 * D,), jnp.float32),
        self_wo=nrm((D, D)), self_bo=jnp.zeros((D,), jnp.float32),
        self_ln_g=jnp.ones((D,), jnp.float32),
        self_ln_b=jnp.zeros((D,), jnp.float32),
        cross_wq=nrm((D, D)), cross_bq=jnp.zeros((D,), jnp.float32),
        cross_wkv=nrm((DV, 2 * D)), cross_bkv=jnp.zeros((2 * D,), jnp.float32),
        cross_wo=nrm((D, D)), cross_bo=jnp.zeros((D,), jnp.float32),
        cross_ln_g=jnp.ones((D,), jnp.float32),
        cross_ln_b=jnp.zeros((D,), jnp.float32),
        fc1_w=nrm((D, INTER)), fc1_b=jnp.zeros((INTER,), jnp.float32),
        fc2_w=nrm((INTER, D)), fc2_b=jnp.zeros((D,), jnp.float32),
        out_ln_g=jnp.ones((D,), jnp.float32),
        out_ln_b=jnp.zeros((D,), jnp.float32))
    bert = dict(dim=D, heads=H, vocab=VOCAB,
                word_emb=nrm((VOCAB, D)), pos_emb=nrm((MAXPOS, D)),
                emb_ln_g=jnp.ones((D,), jnp.float32),
                emb_ln_b=jnp.zeros((D,), jnp.float32),
                layers=[bert_layer],
                head_tr_w=nrm((D, D)), head_tr_b=jnp.zeros((D,), jnp.float32),
                head_ln_g=jnp.ones((D,), jnp.float32),
                head_ln_b=jnp.zeros((D,), jnp.float32),
                dec_w=nrm((D, VOCAB)), dec_b=jnp.zeros((VOCAB,), jnp.float32))

    return dict(vit=vit, bert=bert, bos_token_id=2, pad_token_id=0,
                prompt_length=4)  # len(tokenizer('a picture of ').input_ids)-1


# ---------------------------------------------------------------------------
if __name__ == "__main__":
    key = jax.random.PRNGKey(0)
    k_vid, k_tok, k_par = jax.random.split(key, 3)

    B, N, C, IMG = 2, 2, 3, 16
    T_TXT, VOCAB = 12, 512

    video = jax.random.normal(k_vid, (B, N, C, IMG, IMG), jnp.float32)

    # synthetic "tokenizer" output: caption ids + padding
    input_ids = jax.random.randint(k_tok, (B, T_TXT), 3, VOCAB, jnp.int32)
    input_ids = input_ids.at[1, 9:].set(0)                 # pad tail of sample 1
    attention_mask = (input_ids != 0).astype(jnp.int32)
    attention_mask = attention_mask.at[:, 0].set(1)        # BOS position always valid

    params = init_params(k_par)
    loss = blip_video_caption_forward(video, input_ids, attention_mask, params)
    loss = jax.block_until_ready(loss)
    assert loss.shape == () and jnp.isfinite(loss)
    print("KERNEL_OK")
</pallas_src>

<mosaic_0001>
module attributes {stable_mosaic.version = 11 : i64} {
  func.func @_linear_kernel(%arg0: i32, %arg1: i32, %arg2: i32, %arg3: memref<16x192xf32, #tpu.memory_space<vmem>>, %arg4: memref<192x128xbf16, #tpu.memory_space<vmem>>, %arg5: memref<1x128xf32, #tpu.memory_space<vmem>>, %arg6: memref<16x128xbf16, #tpu.memory_space<vmem>>, %arg7: memref<16x128xf32, #tpu.memory_space<vmem>>) attributes {dimension_semantics = [#tpu.dimension_semantics<parallel>, #tpu.dimension_semantics<parallel>, #tpu.dimension_semantics<arbitrary>], iteration_bounds = array<i64: 1, 1, 1>, scalar_prefetch = 0 : i64, scratch_operands = 1 : i64, tpu.core_type = #tpu.core_type<tc>, window_params = [{transform_indices = @transform_0, window_bounds = array<i64: 16, 192>}, {transform_indices = @transform_1, window_bounds = array<i64: 192, 128>}, {transform_indices = @transform_2, window_bounds = array<i64: 1, 128>}, {transform_indices = @transform_3, window_bounds = array<i64: 16, 128>}]} {
    %c0_i32 = arith.constant 0 : i32
    %0 = arith.cmpi eq, %arg2, %c0_i32 : i32
    %1 = arith.extui %0 : i1 to i32
    %c0_i32_0 = arith.constant 0 : i32
    %2 = arith.cmpi ne, %1, %c0_i32_0 : i32
    scf.if %2 {
      %cst_10 = arith.constant 0.000000e+00 : f32
      %13 = vector.broadcast %cst_10 : f32 to vector<16x128xf32>
      %c0_11 = arith.constant 0 : index
      %c0_12 = arith.constant 0 : index
      %14 = vector.load %arg7[%c0_11, %c0_12] : memref<16x128xf32, #tpu.memory_space<vmem>>, vector<16x128xf32>
      tpu.vector_store %arg7[%c0_11, %c0_12], %13 {strides = array<i32>} : memref<16x128xf32, #tpu.memory_space<vmem>>, vector<16x128xf32>,
    } else {
    }
    %c0 = arith.constant 0 : index
    %c0_1 = arith.constant 0 : index
    %3 = vector.load %arg7[%c0, %c0_1] : memref<16x128xf32, #tpu.memory_space<vmem>>, vector<16x128xf32>
    %c0_2 = arith.constant 0 : index
    %c0_3 = arith.constant 0 : index
    %4 = vector.load %arg3[%c0_2, %c0_3] : memref<16x192xf32, #tpu.memory_space<vmem>>, vector<16x192xf32>
    %5 = arith.truncf %4 : vector<16x192xf32> to vector<16x192xbf16>
    %c0_4 = arith.constant 0 : index
    %c0_5 = arith.constant 0 : index
    %6 = vector.load %arg4[%c0_4, %c0_5] : memref<192x128xbf16, #tpu.memory_space<vmem>>, vector<192x128xbf16>
    %cst = arith.constant dense<0.000000e+00> : vector<16x128xf32>
    %7 = tpu.matmul %5, %6, %cst {dimension_numbers = #tpu.dot_dimension_numbers<[1], [0], [0], [1], [0, 0, 1, 1], [], []>} : vector<16x192xbf16>, vector<192x128xbf16>, vector<16x128xf32> -> vector<16x128xf32>
    %8 = arith.addf %3, %7 : vector<16x128xf32>
    %c0_6 = arith.constant 0 : index
    %c0_7 = arith.constant 0 : index
    %9 = vector.load %arg7[%c0_6, %c0_7] : memref<16x128xf32, #tpu.memory_space<vmem>>, vector<16x128xf32>
    tpu.vector_store %arg7[%c0_6, %c0_7], %8 {strides = array<i32>} : memref<16x128xf32, #tpu.memory_space<vmem>>, vector<16x128xf32>,
    %c0_i32_8 = arith.constant 0 : i32
    %10 = arith.cmpi eq, %arg2, %c0_i32_8 : i32
    %11 = arith.extui %10 : i1 to i32
    %c0_i32_9 = arith.constant 0 : i32
    %12 = arith.cmpi ne, %11, %c0_i32_9 : i32
    scf.if %12 {
      %c0_10 = arith.constant 0 : index
      %c0_11 = arith.constant 0 : index
      %13 = vector.load %arg7[%c0_10, %c0_11] : memref<16x128xf32, #tpu.memory_space<vmem>>, vector<16x128xf32>
      %c0_12 = arith.constant 0 : index
      %c0_13 = arith.constant 0 : index
      %14 = vector.load %arg5[%c0_12, %c0_13] : memref<1x128xf32, #tpu.memory_space<vmem>>, vector<1x128xf32>
      %15 = vector.broadcast %14 : vector<1x128xf32> to vector<16x128xf32>
      %16 = arith.addf %13, %15 : vector<16x128xf32>
      %17 = arith.truncf %16 : vector<16x128xf32> to vector<16x128xbf16>
      %c0_14 = arith.constant 0 : index
      %c0_15 = arith.constant 0 : index
      %18 = vector.load %arg6[%c0_14, %c0_15] : memref<16x128xbf16, #tpu.memory_space<vmem>>, vector<16x128xbf16>
      tpu.vector_store %arg6[%c0_14, %c0_15], %17 {strides = array<i32>} : memref<16x128xbf16, #tpu.memory_space<vmem>>, vector<16x128xbf16>,
    } else {
    }
    return
  }
  func.func @transform_0(%arg0: i32, %arg1: i32, %arg2: i32) -> (i32, i32) {
    %c0_i32 = arith.constant 0 : i32
    return %arg0, %arg2 : i32, i32
  }
  func.func @transform_1(%arg0: i32, %arg1: i32, %arg2: i32) -> (i32, i32) {
    %c0_i32 = arith.constant 0 : i32
    return %arg2, %arg1 : i32, i32
  }
  func.func @transform_2(%arg0: i32, %arg1: i32, %arg2: i32) -> (i32, i32) {
    %c0_i32 = arith.constant 0 : i32
    %c0_i32_0 = arith.constant 0 : i32
    return %c0_i32, %arg1 : i32, i32
  }
  func.func @transform_3(%arg0: i32, %arg1: i32, %arg2: i32) -> (i32, i32) {
    %c0_i32 = arith.constant 0 : i32
    return %arg0, %arg1 : i32, i32
  }
}

</mosaic_0001>

<llo_original>
// kernel: tpu_custom_call.1
$region0: #{tpu_custom_call.1}
  #allocation0 [shape = 'u32[]', space=smem, size = 0x4, offset = 0x4, fixed_abs, tag = 'smem constant byte address 0x4 - core index']
  #allocation1 [shape = 'u32[144,128]{1,0:T(1,128)}', space=vmem, size = 0x12000, scoped, tag = 'internal scratch']
  #allocation2 [shape = 'f32[16,128]{1,0:T(8,128)}', space=vmem, size = 0x2000, scoped, tag = 'scratch operand']
  %s0 = inlined_call_operand.hbm [shape: f32[16,192], index: 0, kind: input, shape index: {}]
  %s1 = inlined_call_operand.hbm [shape: bf16[192,128], index: 1, kind: input, shape index: {}]
  %s2 = inlined_call_operand.vmem [shape: f32[1,128], index: 2, kind: input, shape index: {}]
  %s3 = inlined_call_operand.hbm [shape: bf16[16,128], index: 3, kind: output, shape index: {}]
  %s4 = sld [smem:[#allocation0]]
  $region38: #{tpu_custom_call.1} parent=0
    _
  %s6 = ssub.s32 1, %s4
  %s7 = scalar_select 0, %s6, %s4
  $region1: #{tpu_custom_call.1} parent=0
    #allocation3 [shape = 'u8[16384]{0}', space=vmem, size = 0x4000, scoped, tag = 'input window, operand 0, single buffered']
    #allocation4 [shape = 's32[1]{0}', space=sflag, size = 0x4, scoped, tag = 'scoped memory for tpu_custom_call.1']
    #allocation5 [shape = 's32[1]{0}', space=sflag, size = 0x4, scoped, tag = 'scoped memory for tpu_custom_call.1']
    #allocation6 [shape = 'u8[49152]{0}', space=vmem, size = 0xc000, scoped, tag = 'input window, operand 1, single buffered']
    #allocation7 [shape = 's32[1]{0}', space=sflag, size = 0x4, scoped, tag = 'scoped memory for tpu_custom_call.1']
    #allocation8 [shape = 'u8[4096]{0}', space=vmem, size = 0x1000, scoped, tag = 'output window, operand 0, single buffered']
    %8 = vsyncpa [#allocation4], 0
    %9 = vsyncpa [#allocation7], 0
    %10 = vsyncpa [#allocation5], 0
    // Predicated region
    $region2: #{tpu_custom_call.1} parent=1 // pred_check
      _
    $region3: #{tpu_custom_call.1} parent=1 // pred_check_branch
      %12 = sbr.rel (0) target = $region5
    $region4: #{tpu_custom_call.1} parent=1 // pred_region
      %s14 = ssub.s32 512, 512
      %15 = vsyncadd [#allocation4], %s14
      %s16 = sshll.u32 [#allocation3], 4
      %s17 = int_to_ptr.vmem [resolvable:$true] %s16
      %22 = dma.hbm_to_vmem [thread:$0]  %s0, 512, %s17, [#allocation4], 256, 256, 16
    $region5: #{tpu_custom_call.1} parent=1 // pred_fallthru
      _
    // Predicated region
    $region6: #{tpu_custom_call.1} parent=1 // pred_check
      _
    $region7: #{tpu_custom_call.1} parent=1 // pred_check_branch
      %24 = sbr.rel (0) target = $region9
    $region8: #{tpu_custom_call.1} parent=1 // pred_region
      %s26 = ssub.s32 1536, 1536
      %27 = vsyncadd [#allocation7], %s26
      %s28 = sshll.u32 [#allocation6], 4
      %s29 = int_to_ptr.vmem [resolvable:$true] %s28
      %34 = dma.hbm_to_vmem [thread:$0]  %s1, 1536, %s29, [#allocation7], 64, 64, 4
    $region9: #{tpu_custom_call.1} parent=1 // pred_fallthru
      _
    // Predicated region
    $region10: #{tpu_custom_call.1} parent=1 // pred_check
      _
    $region11: #{tpu_custom_call.1} parent=1 // pred_check_branch
      %36 = sbr.rel (0) target = $region13
    $region12: #{tpu_custom_call.1} parent=1 // pred_region
      _
    $region13: #{tpu_custom_call.1} parent=1 // pred_fallthru
      _
    // Predicated region
    $region14: #{tpu_custom_call.1} parent=1 // pred_check
      _
    $region15: #{tpu_custom_call.1} parent=1 // pred_check_branch
      %38 = sbr.rel (0) target = $region17
    $region16: #{tpu_custom_call.1} parent=1 // pred_region
      %39 = dma.done [#allocation4], 512
    $region17: #{tpu_custom_call.1} parent=1 // pred_fallthru
      _
    // Predicated region
    $region18: #{tpu_custom_call.1} parent=1 // pred_check
      _
    $region19: #{tpu_custom_call.1} parent=1 // pred_check_branch
      %41 = sbr.rel (0) target = $region21
    $region20: #{tpu_custom_call.1} parent=1 // pred_region
      %42 = dma.done [#allocation7], 1536
    $region21: #{tpu_custom_call.1} parent=1 // pred_fallthru
      _
    %p44 = scmp.eq.s32.totalorder 0, 0
    // Predicated region
    $region22: #{tpu_custom_call.1} parent=1 // pred_check
      %p45 = pneg %p44
    $region23: #{tpu_custom_call.1} parent=1 // pred_check_branch
      %47 = sbr.rel (%p45) target = $region25
    $region24: #{tpu_custom_call.1} parent=1 // pred_region
      %48 = vst [vmem:[#allocation2] sm:$0xff] 0.0
      %49 = vst [vmem:[#allocation2 + $0x8] sm:$0xff] 0.0
    $region25: #{tpu_custom_call.1} parent=1 // pred_fallthru
      _
    %v50 = vld [vmem:[#allocation2] sm:$0xff]
    %v51 = vld [vmem:[#allocation2 + $0x8] sm:$0xff]
    %v52 = vld [vmem:[#allocation3] sm:$0xff]
    %v53 = vld [vmem:[#allocation3 + $0x8] sm:$0xff]
    %v54 = vld [vmem:[#allocation3 + $0x10] sm:$0xff]
    %v55 = vld [vmem:[#allocation3 + $0x18] sm:$0xff]
    %v56 = vpack.c.bf16 %v54, %v52
    %v57 = vpack.c.bf16 %v55, %v53
    %v58 = vld [vmem:[#allocation6] sm:$0xf]
    %v59 = vld [vmem:[#allocation6 + $0x4] sm:$0xf]
    %v60 = vld [vmem:[#allocation6 + $0x8] sm:$0xf]
    %v61 = vld [vmem:[#allocation6 + $0xc] sm:$0xf]
    %v62 = vld [vmem:[#allocation6 + $0x10] sm:$0xf]
    %v63 = vld [vmem:[#allocation6 + $0x14] sm:$0xf]
    %v64 = vld [vmem:[#allocation6 + $0x18] sm:$0xf]
    %v65 = vld [vmem:[#allocation6 + $0x1c] sm:$0xf]
    %v66 = vld [vmem:[#allocation6 + $0x20] sm:$0xf]
    %v67 = vld [vmem:[#allocation6 + $0x24] sm:$0xf]
    %v68 = vld [vmem:[#allocation6 + $0x28] sm:$0xf]
    %v69 = vld [vmem:[#allocation6 + $0x2c] sm:$0xf]
    %v70 = vld [vmem:[#allocation6 + $0x30] sm:$0xf]
    %v71 = vld [vmem:[#allocation6 + $0x34] sm:$0xf]
    %v72 = vld [vmem:[#allocation6 + $0x38] sm:$0xf]
    %v73 = vld [vmem:[#allocation6 + $0x3c] sm:$0xf]
    %v74 = vld [vmem:[#allocation6 + $0x40] sm:$0xf]
    %v75 = vld [vmem:[#allocation6 + $0x44] sm:$0xf]
    %v76 = vld [vmem:[#allocation6 + $0x48] sm:$0xf]
    %v77 = vld [vmem:[#allocation6 + $0x4c] sm:$0xf]
    %v78 = vld [vmem:[#allocation6 + $0x50] sm:$0xf]
    %v79 = vld [vmem:[#allocation6 + $0x54] sm:$0xf]
    %v80 = vld [vmem:[#allocation6 + $0x58] sm:$0xf]
    %v81 = vld [vmem:[#allocation6 + $0x5c] sm:$0xf]
    %v106 = vunpack.c.l.b16 %v58
    %v107 = vunpack.c.l.b16 %v59
    %v108 = vunpack.c.l.b16 %v60
    %v109 = vunpack.c.l.b16 %v61
    %v110 = vunpack.c.l.b16 %v62
    %v111 = vunpack.c.l.b16 %v63
    %v112 = vunpack.c.l.b16 %v64
    %v113 = vunpack.c.l.b16 %v65
    %v114 = vunpack.c.l.b16 %v66
    %v115 = vunpack.c.l.b16 %v67
    %v116 = vunpack.c.l.b16 %v68
    %v117 = vunpack.c.l.b16 %v69
    %v118 = vunpack.c.l.b16 %v70
    %v119 = vunpack.c.l.b16 %v71
    %v120 = vunpack.c.l.b16 %v72
    %v121 = vunpack.c.l.b16 %v73
    %v122 = vunpack.c.l.b16 %v74
    %v123 = vunpack.c.l.b16 %v75
    %v124 = vunpack.c.l.b16 %v76
    %v125 = vunpack.c.l.b16 %v77
    %v126 = vunpack.c.l.b16 %v78
    %v127 = vunpack.c.l.b16 %v79
    %v128 = vunpack.c.l.b16 %v80
    %v129 = vunpack.c.l.b16 %v81
    %v130 = vpack.c.b16 %v107, %v106
    %v131 = vpack.c.b16 %v109, %v108
    %v132 = vpack.c.b16 %v111, %v110
    %v133 = vpack.c.b16 %v113, %v112
    %v134 = vpack.c.b16 %v115, %v114
    %v135 = vpack.c.b16 %v117, %v116
    %v136 = vpack.c.b16 %v119, %v118
    %v137 = vpack.c.b16 %v121, %v120
    %v138 = vpack.c.b16 %v123, %v122
    %v139 = vpack.c.b16 %v125, %v124
    %v140 = vpack.c.b16 %v127, %v126
    %v141 = vpack.c.b16 %v129, %v128
    %vm154 = vcmask 523264
    %v156 = vsel %vm154, %v57, 0
    %158 = vmatprep.subr.bf16.mxu0 0
    %159 = vmatpush1.bf16.msra.mxu0 %v130
    %160 = vmatprep.subr.bf16.mxu0 0
    %161 = vmatpush1.bf16.msra.mxu0 %v131
    %162 = vmatprep.subr.bf16.mxu0 0
    %163 = vmatpush1.bf16.msra.mxu0 %v132
    %164 = vmatprep.subr.bf16.mxu0 0
    %165 = vmatpush1.bf16.msra.mxu0 %v133
    %166 = vmatprep.subr.bf16.mxu0 0
    %167 = vmatpush1.bf16.msra.mxu0 %v134
    %168 = vmatprep.subr.bf16.mxu0 0
    %169 = vmatpush1.bf16.msra.mxu0 %v135
    %170 = vmatprep.subr.bf16.mxu0 0
    %171 = vmatpush1.bf16.msra.mxu0 %v136
    %172 = vmatprep.subr.bf16.mxu0 0
    %173 = vmatpush1.bf16.msra.mxu0 %v137
    %174 = vmatprep.subr.bf16.mxu0 0
    %175 = vmatpush1.bf16.msra.mxu0 %v138
    %176 = vmatprep.subr.bf16.mxu0 0
    %177 = vmatpush1.bf16.msra.mxu0 %v139
    %178 = vmatprep.subr.bf16.mxu0 0
    %179 = vmatpush1.bf16.msra.mxu0 %v140
    %180 = vmatprep.subr.bf16.mxu0 0
    %181 = vmatpush1.bf16.msra.mxu0 %v141
    %182 = vmatprep.subr.bf16.mxu0 0
    %183 = vmatpush1.bf16.msra.mxu0 0
    %184 = vmatprep.subr.bf16.mxu0 0
    %185 = vmatpush1.bf16.msra.mxu0 0
    %186 = vmatprep.subr.bf16.mxu0 0
    %187 = vmatpush1.bf16.msra.mxu0 0
    %188 = vmatprep.subr.bf16.mxu0 0
    %189 = vmatpush1.bf16.msra.mxu0 0
    %190 = vmatprep.mubr.bf16.mxu0 %v156
    %191 = vmatmul.mubr.bf16.gmra.mrb[0].mxu0 %v56
    %v192 = vpop.f32.mrb[0].mxu0
    %v193 = vadd.f32 0.0, %v192
    %v194 = vpop.f32.mrb[0].mxu0
    %v195 = vpop.f32.mrb[0].mxu0
    %v196 = vadd.f32 0.0, %v195
    %v197 = vpop.f32.mrb[0].mxu0
    %198 = vdwg.mxu0
    %v199 = vadd.f32 %v50, %v193
    %v200 = vadd.f32 %v51, %v196
    %201 = vst [vmem:[#allocation2] sm:$0xff] %v199
    %202 = vst [vmem:[#allocation2 + $0x8] sm:$0xff] %v200
    // Predicated region
    $region26: #{tpu_custom_call.1} parent=1 // pred_check
      %p203 = pneg %p44
    $region27: #{tpu_custom_call.1} parent=1 // pred_check_branch
      %205 = sbr.rel (%p203) target = $region29
    $region28: #{tpu_custom_call.1} parent=1 // pred_region
      %v206 = vld [vmem:[#allocation2] sm:$0xff]
      %v207 = vld [vmem:[#allocation2 + $0x8] sm:$0xff]
      %v208 = vld [vmem:[%s2] sm:$0x1]
      %v210 = vlaneseq
      %v211 = vshrl.u32 %v210, 7
      %v212 = vsub.s32 0, %v211
      %v213 = vrot.slane %v208, %v212
      %v215 = vadd.f32 %v206, %v213
      %v216 = vadd.f32 %v207, %v213
      %v217 = vpack.c.bf16 %v216, %v215
      %v219 = vunpack.c.l.b16 %v217
      %v220 = vunpack.c.h.b16 %v217
      %v221 = vpack.c.b16 %v219, %v219
      %v222 = vpack.c.b16 %v220, %v220
      %225 = vst [vmem:[#allocation8] sm:$0xf] %v221
      %226 = vst [vmem:[#allocation8 + $0x4] sm:$0xf] %v222
    $region29: #{tpu_custom_call.1} parent=1 // pred_fallthru
      _
    // Predicated region
    $region30: #{tpu_custom_call.1} parent=1 // pred_check
      _
    $region31: #{tpu_custom_call.1} parent=1 // pred_check_branch
      %228 = sbr.rel (0) target = $region33
    $region32: #{tpu_custom_call.1} parent=1 // pred_region
      %s230 = ssub.s32 128, 128
      %231 = vsyncadd [#allocation5], %s230
      %s232 = sshll.u32 [#allocation8], 4
      %s233 = int_to_ptr.vmem [resolvable:$true] %s232
      %238 = dma.vmem_to_hbm [thread:$0]  %s233, 128, %s3, [#allocation5], 64, 64, 4
    $region33: #{tpu_custom_call.1} parent=1 // pred_fallthru
      _
    // Predicated region
    $region34: #{tpu_custom_call.1} parent=1 // pred_check
      _
    $region35: #{tpu_custom_call.1} parent=1 // pred_check_branch
      %240 = sbr.rel (0) target = $region37
    $region36: #{tpu_custom_call.1} parent=1 // pred_region
      %241 = dma.done [#allocation5], 128
    $region37: #{tpu_custom_call.1} parent=1 // pred_fallthru
      _
    %242 = vsyncpa [#allocation4], 1
    %243 = vsyncpa [#allocation7], 1
    %244 = vsyncpa [#allocation5], 1

</llo_original>
